<compile_context>
chip_gen: v7x
topology: tpu7x:2x2x1
jax: 0.10.0
libtpu: 0.0.40
codegen_flags: <defaults>
</compile_context>

<pallas_src>
import functools

import jax
import jax.numpy as jnp
from jax.experimental import pallas as pl
from jax.experimental.pallas import tpu as pltpu


def _agcrn_cell_kernel(xs_ref, a_ref, gw_ref, gb_ref, uw_ref, ub_ref, h_ref, *,
                       cheb_k, dim_in, hidden):
    f32 = jnp.float32
    A = a_ref[...].astype(f32)        # (R, R)  block-diag kron(I_tile, support)
    xs = xs_ref[...].astype(f32)      # (R, dim_in + hidden)   [x | state] rows
    gw = gw_ref[...].astype(f32)      # (cheb_k*(dim_in+hidden), 2*hidden)
    uw = uw_ref[...].astype(f32)      # (cheb_k*(dim_in+hidden), hidden)
    gb = gb_ref[...].astype(f32)      # (1, 2*hidden)
    ub = ub_ref[...].astype(f32)      # (1, hidden)

    def cheb(feat):
        # Feature-side Chebyshev recursion: T_0 f, T_1 f, T_k f = 2 A T_{k-1} f - T_{k-2} f
        gs = [feat]
        if cheb_k > 1:
            gs.append(jnp.dot(A, feat, preferred_element_type=f32))
        for _ in range(2, cheb_k):
            gs.append(2.0 * jnp.dot(A, gs[-1], preferred_element_type=f32) - gs[-2])
        return gs

    # Graph conv of [x | state] for all batches in one shot.
    g = cheb(xs)                                   # cheb_k x (R, dim_in+hidden)
    xg = jnp.concatenate(g, axis=1)                # (R, cheb_k*(dim_in+hidden))

    # Gate projection: one wide matmul, bias added once.
    zr = jax.nn.sigmoid(jnp.dot(xg, gw, preferred_element_type=f32) + gb)
    z = zr[:, :hidden]
    r = zr[:, hidden:]

    # Candidate branch: reuse the x-side graph features, re-run state side on z*state.
    state = xs[:, dim_in:]
    gzs = cheb(z * state)                          # cheb_k x (R, hidden)
    cand = jnp.concatenate(
        [piece for k in range(cheb_k) for piece in (g[k][:, :dim_in], gzs[k])],
        axis=1)                                    # (R, cheb_k*(dim_in+hidden))
    hc = jnp.tanh(jnp.dot(cand, uw, preferred_element_type=f32) + ub)

    h_ref[...] = (r * state + (1.0 - r) * hc).astype(h_ref.dtype)


def agcrn_cell(x, state, support, gate_w, gate_b, update_w, update_b, *,
               cheb_k, batch_tile=None):
    B, N, dim_in = x.shape
    hidden = state.shape[-1]
    din_h = dim_in + hidden
    assert gate_w.shape == (cheb_k * din_h, 2 * hidden)
    assert update_w.shape == (cheb_k * din_h, hidden)

    if batch_tile is None:
        batch_tile = B                 # single grid step (best on 1-TC chips);
    assert B % batch_tile == 0         # set batch_tile = B // 2 on v7x (2 TCs)
    n_tiles = B // batch_tile
    rows = batch_tile * N

    # [x | state] with batch flattened into rows -> free reshapes, no transposes.
    xs = jnp.concatenate([x, state], axis=-1).reshape(B * N, din_h)

    # Block-diagonal support so one matmul applies A to every batch in the tile.
    a_blk = jnp.kron(jnp.eye(batch_tile, dtype=support.dtype), support)

    gb = gate_b.reshape(1, 2 * hidden)
    ub = update_b.reshape(1, hidden)

    kernel = functools.partial(_agcrn_cell_kernel,
                               cheb_k=cheb_k, dim_in=dim_in, hidden=hidden)

    h2 = pl.pallas_call(
        kernel,
        out_shape=jax.ShapeDtypeStruct((B * N, hidden), x.dtype),
        grid=(n_tiles,),
        in_specs=[
            pl.BlockSpec((rows, din_h), lambda i: (i, 0)),
            pl.BlockSpec((rows, rows), lambda i: (0, 0)),
            pl.BlockSpec((cheb_k * din_h, 2 * hidden), lambda i: (0, 0)),
            pl.BlockSpec((1, 2 * hidden), lambda i: (0, 0)),
            pl.BlockSpec((cheb_k * din_h, hidden), lambda i: (0, 0)),
            pl.BlockSpec((1, hidden), lambda i: (0, 0)),
        ],
        out_specs=pl.BlockSpec((rows, hidden), lambda i: (i, 0)),
        compiler_params=pltpu.CompilerParams(
            dimension_semantics=("parallel",)),
    )(xs, a_blk, gate_w, gb, update_w, ub)
    return h2.reshape(B, N, hidden)


def agcrn_cell_ref(x, state, support, gate_w, gate_b, update_w, update_b, *, cheb_k):
    """Pure-JAX reference mirroring the PyTorch forward (single 2D support)."""
    N = support.shape[0]
    supports = [jnp.eye(N, dtype=support.dtype), support]
    for _ in range(2, cheb_k):
        supports.append(2.0 * support @ supports[-1] - supports[-2])
    supports = supports[:cheb_k]

    def agcn(feat, w, b):
        xg = jnp.concatenate(
            [jnp.einsum('nm,bmc->bnc', T, feat) for T in supports], axis=-1)
        return jnp.einsum('bni,io->bno', xg, w) + b

    inp = jnp.concatenate([x, state], axis=-1)
    z_r = jax.nn.sigmoid(agcn(inp, gate_w, gate_b))
    hidden = state.shape[-1]
    z, r = z_r[..., :hidden], z_r[..., hidden:]
    cand_in = jnp.concatenate([x, z * state], axis=-1)
    hc = jnp.tanh(agcn(cand_in, update_w, update_b))
    return r * state + (1.0 - r) * hc


if __name__ == "__main__":
    # Small shapes consistent with the module: node_num=16, dim_in=4, hidden=32
    B, N, DIM_IN, HIDDEN, CHEB_K = 2, 16, 4, 32, 3
    key = jax.random.PRNGKey(0)
    k_x, k_s, k_a, k_gw, k_uw = jax.random.split(key, 5)

    x = jax.random.normal(k_x, (B, N, DIM_IN), dtype=jnp.float32)
    state = jax.random.normal(k_s, (B, N, HIDDEN), dtype=jnp.float32)
    # row-normalized random adjacency as the single 2D support
    support = jax.nn.softmax(
        jax.random.normal(k_a, (N, N), dtype=jnp.float32), axis=-1)

    din_total = DIM_IN + HIDDEN
    gate_w = jax.random.normal(k_gw, (CHEB_K * din_total, 2 * HIDDEN), jnp.float32) * (
        (2.0 / (CHEB_K * din_total + 2 * HIDDEN)) ** 0.5)
    gate_b = jnp.zeros((2 * HIDDEN,), jnp.float32)
    update_w = jax.random.normal(k_uw, (CHEB_K * din_total, HIDDEN), jnp.float32) * (
        (2.0 / (CHEB_K * din_total + HIDDEN)) ** 0.5)
    update_b = jnp.zeros((HIDDEN,), jnp.float32)

    h = agcrn_cell(x, state, support, gate_w, gate_b, update_w, update_b,
                   cheb_k=CHEB_K)
    h = jax.block_until_ready(h)

    h_ref = agcrn_cell_ref(x, state, support, gate_w, gate_b, update_w, update_b,
                           cheb_k=CHEB_K)
    assert h.shape == (B, N, HIDDEN)
    assert jnp.allclose(h, h_ref, atol=1e-4, rtol=1e-4), "mismatch vs JAX reference"
    print("KERNEL_OK")
</pallas_src>

<mosaic_0001>
module attributes {stable_mosaic.version = 11 : i64} {
  func.func @_agcrn_cell_kernel(%arg0: i32, %arg1: memref<32x36xf32, #tpu.memory_space<vmem>>, %arg2: memref<32x32xf32, #tpu.memory_space<vmem>>, %arg3: memref<108x64xf32, #tpu.memory_space<vmem>>, %arg4: memref<1x64xf32, #tpu.memory_space<vmem>>, %arg5: memref<108x32xf32, #tpu.memory_space<vmem>>, %arg6: memref<1x32xf32, #tpu.memory_space<vmem>>, %arg7: memref<32x32xf32, #tpu.memory_space<vmem>>) attributes {dimension_semantics = [#tpu.dimension_semantics<parallel>], iteration_bounds = array<i64: 1>, scalar_prefetch = 0 : i64, scratch_operands = 0 : i64, tpu.core_type = #tpu.core_type<tc>, window_params = [{transform_indices = @transform_0, window_bounds = array<i64: 32, 36>}, {pipeline_mode = #tpu.pipeline_mode<synchronous>, transform_indices = @transform_1, window_bounds = array<i64: 32, 32>}, {pipeline_mode = #tpu.pipeline_mode<synchronous>, transform_indices = @transform_2, window_bounds = array<i64: 108, 64>}, {pipeline_mode = #tpu.pipeline_mode<synchronous>, transform_indices = @transform_3, window_bounds = array<i64: 1, 64>}, {pipeline_mode = #tpu.pipeline_mode<synchronous>, transform_indices = @transform_4, window_bounds = array<i64: 108, 32>}, {pipeline_mode = #tpu.pipeline_mode<synchronous>, transform_indices = @transform_5, window_bounds = array<i64: 1, 32>}, {transform_indices = @transform_6, window_bounds = array<i64: 32, 32>}]} {
    %c0 = arith.constant 0 : index
    %c0_0 = arith.constant 0 : index
    %0 = vector.load %arg2[%c0, %c0_0] : memref<32x32xf32, #tpu.memory_space<vmem>>, vector<32x32xf32>
    %c0_1 = arith.constant 0 : index
    %c0_2 = arith.constant 0 : index
    %1 = vector.load %arg1[%c0_1, %c0_2] : memref<32x36xf32, #tpu.memory_space<vmem>>, vector<32x36xf32>
    %c0_3 = arith.constant 0 : index
    %c0_4 = arith.constant 0 : index
    %2 = vector.load %arg3[%c0_3, %c0_4] : memref<108x64xf32, #tpu.memory_space<vmem>>, vector<108x64xf32>
    %c0_5 = arith.constant 0 : index
    %c0_6 = arith.constant 0 : index
    %3 = vector.load %arg5[%c0_5, %c0_6] : memref<108x32xf32, #tpu.memory_space<vmem>>, vector<108x32xf32>
    %c0_7 = arith.constant 0 : index
    %c0_8 = arith.constant 0 : index
    %4 = vector.load %arg4[%c0_7, %c0_8] : memref<1x64xf32, #tpu.memory_space<vmem>>, vector<1x64xf32>
    %c0_9 = arith.constant 0 : index
    %c0_10 = arith.constant 0 : index
    %5 = vector.load %arg6[%c0_9, %c0_10] : memref<1x32xf32, #tpu.memory_space<vmem>>, vector<1x32xf32>
    %cst = arith.constant dense<0.000000e+00> : vector<32x36xf32>
    %6 = tpu.matmul %0, %1, %cst {dimension_numbers = #tpu.dot_dimension_numbers<[1], [0], [0], [1], [0, 0, 1, 1], [], []>} : vector<32x32xf32>, vector<32x36xf32>, vector<32x36xf32> -> vector<32x36xf32>
    %cst_11 = arith.constant dense<0.000000e+00> : vector<32x36xf32>
    %7 = tpu.matmul %0, %6, %cst_11 {dimension_numbers = #tpu.dot_dimension_numbers<[1], [0], [0], [1], [0, 0, 1, 1], [], []>} : vector<32x32xf32>, vector<32x36xf32>, vector<32x36xf32> -> vector<32x36xf32>
    %cst_12 = arith.constant 2.000000e+00 : f32
    %8 = vector.broadcast %cst_12 : f32 to vector<32x36xf32>
    %9 = arith.mulf %8, %7 : vector<32x36xf32>
    %10 = arith.subf %9, %1 : vector<32x36xf32>
    %11 = tpu.concatenate %1, %6, %10 in 1 : vector<32x36xf32>, vector<32x36xf32>, vector<32x36xf32> -> vector<32x108xf32>
    %cst_13 = arith.constant dense<0.000000e+00> : vector<32x64xf32>
    %12 = tpu.matmul %11, %2, %cst_13 {dimension_numbers = #tpu.dot_dimension_numbers<[1], [0], [0], [1], [0, 0, 1, 1], [], []>} : vector<32x108xf32>, vector<108x64xf32>, vector<32x64xf32> -> vector<32x64xf32>
    %13 = vector.broadcast %4 : vector<1x64xf32> to vector<32x64xf32>
    %14 = arith.addf %12, %13 : vector<32x64xf32>
    %15 = arith.negf %14 : vector<32x64xf32>
    %16 = math.exp %15 : vector<32x64xf32>
    %cst_14 = arith.constant 1.000000e+00 : f32
    %17 = vector.broadcast %cst_14 : f32 to vector<32x64xf32>
    %18 = arith.addf %17, %16 : vector<32x64xf32>
    %19 = arith.divf %17, %18 : vector<32x64xf32>
    %20 = vector.extract_strided_slice %19 {offsets = [0, 0], sizes = [32, 32], strides = [1, 1]} : vector<32x64xf32> to vector<32x32xf32>
    %21 = vector.extract_strided_slice %19 {offsets = [0, 32], sizes = [32, 32], strides = [1, 1]} : vector<32x64xf32> to vector<32x32xf32>
    %22 = vector.extract_strided_slice %1 {offsets = [0, 4], sizes = [32, 32], strides = [1, 1]} : vector<32x36xf32> to vector<32x32xf32>
    %23 = arith.mulf %20, %22 : vector<32x32xf32>
    %cst_15 = arith.constant dense<0.000000e+00> : vector<32x32xf32>
    %24 = tpu.matmul %0, %23, %cst_15 {dimension_numbers = #tpu.dot_dimension_numbers<[1], [0], [0], [1], [0, 0, 1, 1], [], []>} : vector<32x32xf32>, vector<32x32xf32>, vector<32x32xf32> -> vector<32x32xf32>
    %cst_16 = arith.constant dense<0.000000e+00> : vector<32x32xf32>
    %25 = tpu.matmul %0, %24, %cst_16 {dimension_numbers = #tpu.dot_dimension_numbers<[1], [0], [0], [1], [0, 0, 1, 1], [], []>} : vector<32x32xf32>, vector<32x32xf32>, vector<32x32xf32> -> vector<32x32xf32>
    %cst_17 = arith.constant 2.000000e+00 : f32
    %26 = vector.broadcast %cst_17 : f32 to vector<32x32xf32>
    %27 = arith.mulf %26, %25 : vector<32x32xf32>
    %28 = arith.subf %27, %23 : vector<32x32xf32>
    %29 = vector.extract_strided_slice %1 {offsets = [0, 0], sizes = [32, 4], strides = [1, 1]} : vector<32x36xf32> to vector<32x4xf32>
    %30 = vector.extract_strided_slice %6 {offsets = [0, 0], sizes = [32, 4], strides = [1, 1]} : vector<32x36xf32> to vector<32x4xf32>
    %31 = vector.extract_strided_slice %10 {offsets = [0, 0], sizes = [32, 4], strides = [1, 1]} : vector<32x36xf32> to vector<32x4xf32>
    %32 = tpu.concatenate %29, %23, %30, %24, %31, %28 in 1 : vector<32x4xf32>, vector<32x32xf32>, vector<32x4xf32>, vector<32x32xf32>, vector<32x4xf32>, vector<32x32xf32> -> vector<32x108xf32>
    %cst_18 = arith.constant dense<0.000000e+00> : vector<32x32xf32>
    %33 = tpu.matmul %32, %3, %cst_18 {dimension_numbers = #tpu.dot_dimension_numbers<[1], [0], [0], [1], [0, 0, 1, 1], [], []>} : vector<32x108xf32>, vector<108x32xf32>, vector<32x32xf32> -> vector<32x32xf32>
    %34 = vector.broadcast %5 : vector<1x32xf32> to vector<32x32xf32>
    %35 = arith.addf %33, %34 : vector<32x32xf32>
    %36 = math.tanh %35 : vector<32x32xf32>
    %37 = arith.mulf %21, %22 : vector<32x32xf32>
    %cst_19 = arith.constant 1.000000e+00 : f32
    %38 = vector.broadcast %cst_19 : f32 to vector<32x32xf32>
    %39 = arith.subf %38, %21 : vector<32x32xf32>
    %40 = arith.mulf %39, %36 : vector<32x32xf32>
    %41 = arith.addf %37, %40 : vector<32x32xf32>
    %c0_20 = arith.constant 0 : index
    %c0_21 = arith.constant 0 : index
    %42 = vector.load %arg7[%c0_20, %c0_21] : memref<32x32xf32, #tpu.memory_space<vmem>>, vector<32x32xf32>
    tpu.vector_store %arg7[%c0_20, %c0_21], %41 {strides = array<i32>} : memref<32x32xf32, #tpu.memory_space<vmem>>, vector<32x32xf32>,
    return
  }
  func.func @transform_0(%arg0: i32) -> (i32, i32) {
    %c0_i32 = arith.constant 0 : i32
    %c0_i32_0 = arith.constant 0 : i32
    return %arg0, %c0_i32 : i32, i32
  }
  func.func @transform_1(%arg0: i32) -> (i32, i32) {
    %c0_i32 = arith.constant 0 : i32
    %c0_i32_0 = arith.constant 0 : i32
    %c0_i32_1 = arith.constant 0 : i32
    return %c0_i32, %c0_i32_0 : i32, i32
  }
  func.func @transform_2(%arg0: i32) -> (i32, i32) {
    %c0_i32 = arith.constant 0 : i32
    %c0_i32_0 = arith.constant 0 : i32
    %c0_i32_1 = arith.constant 0 : i32
    return %c0_i32, %c0_i32_0 : i32, i32
  }
  func.func @transform_3(%arg0: i32) -> (i32, i32) {
    %c0_i32 = arith.constant 0 : i32
    %c0_i32_0 = arith.constant 0 : i32
    %c0_i32_1 = arith.constant 0 : i32
    return %c0_i32, %c0_i32_0 : i32, i32
  }
  func.func @transform_4(%arg0: i32) -> (i32, i32) {
    %c0_i32 = arith.constant 0 : i32
    %c0_i32_0 = arith.constant 0 : i32
    %c0_i32_1 = arith.constant 0 : i32
    return %c0_i32, %c0_i32_0 : i32, i32
  }
  func.func @transform_5(%arg0: i32) -> (i32, i32) {
    %c0_i32 = arith.constant 0 : i32
    %c0_i32_0 = arith.constant 0 : i32
    %c0_i32_1 = arith.constant 0 : i32
    return %c0_i32, %c0_i32_0 : i32, i32
  }
  func.func @transform_6(%arg0: i32) -> (i32, i32) {
    %c0_i32 = arith.constant 0 : i32
    %c0_i32_0 = arith.constant 0 : i32
    return %arg0, %c0_i32 : i32, i32
  }
}

</mosaic_0001>

<llo_original>
// kernel: tpu_custom_call.1
$region0: #{tpu_custom_call.1}
  #allocation0 [shape = 'u32[]', space=smem, size = 0x4, offset = 0x4, fixed_abs, tag = 'smem constant byte address 0x4 - core index']
  #allocation1 [shape = 'u32[144,128]{1,0:T(1,128)}', space=vmem, size = 0x12000, scoped, tag = 'internal scratch']
  %s0 = inlined_call_operand.vmem [shape: f32[32,36], index: 0, kind: input, shape index: {}]
  %s1 = inlined_call_operand.vmem [shape: f32[32,32], index: 1, kind: input, shape index: {}]
  %s2 = inlined_call_operand.vmem [shape: f32[108,64], index: 2, kind: input, shape index: {}]
  %s3 = inlined_call_operand.vmem [shape: f32[1,64], index: 3, kind: input, shape index: {}]
  %s4 = inlined_call_operand.vmem [shape: f32[108,32], index: 4, kind: input, shape index: {}]
  %s5 = inlined_call_operand.vmem [shape: f32[1,32], index: 5, kind: input, shape index: {}]
  %s6 = inlined_call_operand.hbm [shape: f32[32,32], index: 6, kind: output, shape index: {}]
  %s7 = sld [smem:[#allocation0]]
  $region34: #{tpu_custom_call.1} parent=0
    _
  %s9 = ssub.s32 1, %s7
  %s10 = scalar_select 0, %s9, %s7
  $region1: #{tpu_custom_call.1} parent=0
    #allocation2 [shape = 'u8[16384]{0}', space=vmem, size = 0x4000, scoped, tag = 'output window, operand 0, single buffered']
    #allocation3 [shape = 's32[1]{0}', space=sflag, size = 0x4, scoped, tag = 'scoped memory for tpu_custom_call.1']
    %11 = vsyncpa [#allocation3], 0
    // Predicated region
    $region2: #{tpu_custom_call.1} parent=1 // pred_check
      _
    $region3: #{tpu_custom_call.1} parent=1 // pred_check_branch
      %13 = sbr.rel (0) target = $region5
    $region4: #{tpu_custom_call.1} parent=1 // pred_region
      _
    $region5: #{tpu_custom_call.1} parent=1 // pred_fallthru
      _
    // Predicated region
    $region6: #{tpu_custom_call.1} parent=1 // pred_check
      _
    $region7: #{tpu_custom_call.1} parent=1 // pred_check_branch
      %15 = sbr.rel (0) target = $region9
    $region8: #{tpu_custom_call.1} parent=1 // pred_region
      _
    $region9: #{tpu_custom_call.1} parent=1 // pred_fallthru
      _
    // Predicated region
    $region10: #{tpu_custom_call.1} parent=1 // pred_check
      _
    $region11: #{tpu_custom_call.1} parent=1 // pred_check_branch
      %17 = sbr.rel (0) target = $region13
    $region12: #{tpu_custom_call.1} parent=1 // pred_region
      _
    $region13: #{tpu_custom_call.1} parent=1 // pred_fallthru
      _
    // Predicated region
    $region14: #{tpu_custom_call.1} parent=1 // pred_check
      _
    $region15: #{tpu_custom_call.1} parent=1 // pred_check_branch
      %19 = sbr.rel (0) target = $region17
    $region16: #{tpu_custom_call.1} parent=1 // pred_region
      _
    $region17: #{tpu_custom_call.1} parent=1 // pred_fallthru
      _
    // Predicated region
    $region18: #{tpu_custom_call.1} parent=1 // pred_check
      _
    $region19: #{tpu_custom_call.1} parent=1 // pred_check_branch
      %21 = sbr.rel (0) target = $region21
    $region20: #{tpu_custom_call.1} parent=1 // pred_region
      _
    $region21: #{tpu_custom_call.1} parent=1 // pred_fallthru
      _
    // Predicated region
    $region22: #{tpu_custom_call.1} parent=1 // pred_check
      _
    $region23: #{tpu_custom_call.1} parent=1 // pred_check_branch
      %23 = sbr.rel (0) target = $region25
    $region24: #{tpu_custom_call.1} parent=1 // pred_region
      _
    $region25: #{tpu_custom_call.1} parent=1 // pred_fallthru
      _
    %v24 = vld [vmem:[%s1] sm:$0xff]
    %v25 = vld [vmem:[%s1 + $0x8] sm:$0xff]
    %v26 = vld [vmem:[%s1 + $0x10] sm:$0xff]
    %v27 = vld [vmem:[%s1 + $0x18] sm:$0xff]
    %v28 = vld [vmem:[%s0] sm:$0xff]
    %v29 = vld [vmem:[%s0 + $0x8] sm:$0xff]
    %v30 = vld [vmem:[%s0 + $0x10] sm:$0xff]
    %v31 = vld [vmem:[%s0 + $0x18] sm:$0xff]
    %v32 = vld [vmem:[%s2] sm:$0xff]
    %v33 = vld [vmem:[%s2 + $0x8] sm:$0xff]
    %v34 = vld [vmem:[%s2 + $0x10] sm:$0xff]
    %v35 = vld [vmem:[%s2 + $0x18] sm:$0xff]
    %v36 = vld [vmem:[%s2 + $0x20] sm:$0xff]
    %v37 = vld [vmem:[%s2 + $0x28] sm:$0xff]
    %v38 = vld [vmem:[%s2 + $0x30] sm:$0xff]
    %v39 = vld [vmem:[%s2 + $0x38] sm:$0xff]
    %v40 = vld [vmem:[%s2 + $0x40] sm:$0xff]
    %v41 = vld [vmem:[%s2 + $0x48] sm:$0xff]
    %v42 = vld [vmem:[%s2 + $0x50] sm:$0xff]
    %v43 = vld [vmem:[%s2 + $0x58] sm:$0xff]
    %v44 = vld [vmem:[%s2 + $0x60] sm:$0xff]
    %v45 = vld [vmem:[%s2 + $0x68] sm:$0xf]
    %v46 = vld [vmem:[%s4] sm:$0xff]
    %v47 = vld [vmem:[%s4 + $0x8] sm:$0xff]
    %v48 = vld [vmem:[%s4 + $0x10] sm:$0xff]
    %v49 = vld [vmem:[%s4 + $0x18] sm:$0xff]
    %v50 = vld [vmem:[%s4 + $0x20] sm:$0xff]
    %v51 = vld [vmem:[%s4 + $0x28] sm:$0xff]
    %v52 = vld [vmem:[%s4 + $0x30] sm:$0xff]
    %v53 = vld [vmem:[%s4 + $0x38] sm:$0xff]
    %v54 = vld [vmem:[%s4 + $0x40] sm:$0xff]
    %v55 = vld [vmem:[%s4 + $0x48] sm:$0xff]
    %v56 = vld [vmem:[%s4 + $0x50] sm:$0xff]
    %v57 = vld [vmem:[%s4 + $0x58] sm:$0xff]
    %v58 = vld [vmem:[%s4 + $0x60] sm:$0xff]
    %v59 = vld [vmem:[%s4 + $0x68] sm:$0xf]
    %v60 = vld [vmem:[%s3] sm:$0x1]
    %v61 = vld [vmem:[%s5] sm:$0x1]
    %vm62 = vcmask 261120
    %v64 = vsel %vm62, %v24, 0
    %v67 = vsel %vm62, %v25, 0
    %v70 = vsel %vm62, %v26, 0
    %v73 = vsel %vm62, %v27, 0
    %75 = vmatprep.subr.mxu0 0.0
    %76 = vmatpush1.msra.mxu0 %v28
    %77 = vmatprep.subr.mxu0 0.0
    %78 = vmatpush1.msra.mxu0 %v29
    %79 = vmatprep.subr.mxu0 0.0
    %80 = vmatpush1.msra.mxu0 %v30
    %81 = vmatprep.subr.mxu0 0.0
    %82 = vmatpush1.msra.mxu0 %v31
    %83 = vmatprep.subr.mxu0 0.0
    %84 = vmatpush1.msra.mxu0 0.0
    %85 = vmatprep.subr.mxu0 0.0
    %86 = vmatpush1.msra.mxu0 0.0
    %87 = vmatprep.subr.mxu0 0.0
    %88 = vmatpush1.msra.mxu0 0.0
    %89 = vmatprep.subr.mxu0 0.0
    %90 = vmatpush1.msra.mxu0 0.0
    %91 = vmatprep.subr.mxu0 0.0
    %92 = vmatpush1.msra.mxu0 0.0
    %93 = vmatprep.subr.mxu0 0.0
    %94 = vmatpush1.msra.mxu0 0.0
    %95 = vmatprep.subr.mxu0 0.0
    %96 = vmatpush1.msra.mxu0 0.0
    %97 = vmatprep.subr.mxu0 0.0
    %98 = vmatpush1.msra.mxu0 0.0
    %99 = vmatprep.subr.mxu0 0.0
    %100 = vmatpush1.msra.mxu0 0.0
    %101 = vmatprep.subr.mxu0 0.0
    %102 = vmatpush1.msra.mxu0 0.0
    %103 = vmatprep.subr.mxu0 0.0
    %104 = vmatpush1.msra.mxu0 0.0
    %105 = vmatprep.subr.mxu0 0.0
    %106 = vmatpush1.msra.mxu0 0.0
    %107 = vmatprep.subr.mxu0 0.0
    %108 = vmatpush1.msra.mxu0 0.0
    %109 = vmatprep.subr.mxu0 0.0
    %110 = vmatpush1.msra.mxu0 0.0
    %111 = vmatprep.subr.mxu0 0.0
    %112 = vmatpush1.msra.mxu0 0.0
    %113 = vmatprep.subr.mxu0 0.0
    %114 = vmatpush1.msra.mxu0 0.0
    %115 = vmatprep.subr.mxu0 0.0
    %116 = vmatpush1.msra.mxu0 0.0
    %117 = vmatprep.subr.mxu0 0.0
    %118 = vmatpush1.msra.mxu0 0.0
    %119 = vmatprep.subr.mxu0 0.0
    %120 = vmatpush1.msra.mxu0 0.0
    %121 = vmatprep.subr.mxu0 0.0
    %122 = vmatpush1.msra.mxu0 0.0
    %123 = vmatprep.subr.mxu0 0.0
    %124 = vmatpush1.msra.mxu0 0.0
    %125 = vmatprep.subr.mxu0 0.0
    %126 = vmatpush1.msra.mxu0 0.0
    %127 = vmatprep.subr.mxu0 0.0
    %128 = vmatpush1.msra.mxu0 0.0
    %129 = vmatprep.subr.mxu0 0.0
    %130 = vmatpush1.msra.mxu0 0.0
    %131 = vmatprep.subr.mxu0 0.0
    %132 = vmatpush1.msra.mxu0 0.0
    %133 = vmatprep.subr.mxu0 0.0
    %134 = vmatpush1.msra.mxu0 0.0
    %135 = vmatprep.subr.mxu0 0.0
    %136 = vmatpush1.msra.mxu0 0.0
    %137 = vmatprep.subr.mxu0 0.0
    %138 = vmatpush1.msra.mxu0 0.0
    %139 = vmatprep.mubr.f32.mxu0 0.0
    %140 = vmatmul.mubr.f32.gmra.mrb[0].mxu0 %v64
    %v141 = vpop.f32.mrb[0].mxu0
    %v142 = vadd.f32 0.0, %v141
    %v143 = vpop.f32.mrb[0].mxu0
    %144 = vmatprep.mubr.f32.mxu0 0.0
    %145 = vmatmul.mubr.f32.gmra.mrb[0].mxu0 %v67
    %v146 = vpop.f32.mrb[0].mxu0
    %v147 = vadd.f32 0.0, %v146
    %v148 = vpop.f32.mrb[0].mxu0
    %149 = vmatprep.mubr.f32.mxu0 0.0
    %150 = vmatmul.mubr.f32.gmra.mrb[0].mxu0 %v70
    %v151 = vpop.f32.mrb[0].mxu0
    %v152 = vadd.f32 0.0, %v151
    %v153 = vpop.f32.mrb[0].mxu0
    %154 = vmatprep.mubr.f32.mxu0 0.0
    %155 = vmatmul.mubr.f32.gmra.mrb[0].mxu0 %v73
    %v156 = vpop.f32.mrb[0].mxu0
    %v157 = vadd.f32 0.0, %v156
    %v158 = vpop.f32.mrb[0].mxu0
    %159 = vdwg.mxu0
    %160 = vmatprep.subr.mxu0 0.0
    %161 = vmatpush1.msra.mxu0 %v142
    %162 = vmatprep.subr.mxu0 0.0
    %163 = vmatpush1.msra.mxu0 %v147
    %164 = vmatprep.subr.mxu0 0.0
    %165 = vmatpush1.msra.mxu0 %v152
    %166 = vmatprep.subr.mxu0 0.0
    %167 = vmatpush1.msra.mxu0 %v157
    %168 = vmatprep.subr.mxu0 0.0
    %169 = vmatpush1.msra.mxu0 0.0
    %170 = vmatprep.subr.mxu0 0.0
    %171 = vmatpush1.msra.mxu0 0.0
    %172 = vmatprep.subr.mxu0 0.0
    %173 = vmatpush1.msra.mxu0 0.0
    %174 = vmatprep.subr.mxu0 0.0
    %175 = vmatpush1.msra.mxu0 0.0
    %176 = vmatprep.subr.mxu0 0.0
    %177 = vmatpush1.msra.mxu0 0.0
    %178 = vmatprep.subr.mxu0 0.0
    %179 = vmatpush1.msra.mxu0 0.0
    %180 = vmatprep.subr.mxu0 0.0
    %181 = vmatpush1.msra.mxu0 0.0
    %182 = vmatprep.subr.mxu0 0.0
    %183 = vmatpush1.msra.mxu0 0.0
    %184 = vmatprep.subr.mxu0 0.0
    %185 = vmatpush1.msra.mxu0 0.0
    %186 = vmatprep.subr.mxu0 0.0
    %187 = vmatpush1.msra.mxu0 0.0
    %188 = vmatprep.subr.mxu0 0.0
    %189 = vmatpush1.msra.mxu0 0.0
    %190 = vmatprep.subr.mxu0 0.0
    %191 = vmatpush1.msra.mxu0 0.0
    %192 = vmatprep.subr.mxu0 0.0
    %193 = vmatpush1.msra.mxu0 0.0
    %194 = vmatprep.subr.mxu0 0.0
    %195 = vmatpush1.msra.mxu0 0.0
    %196 = vmatprep.subr.mxu0 0.0
    %197 = vmatpush1.msra.mxu0 0.0
    %198 = vmatprep.subr.mxu0 0.0
    %199 = vmatpush1.msra.mxu0 0.0
    %200 = vmatprep.subr.mxu0 0.0
    %201 = vmatpush1.msra.mxu0 0.0
    %202 = vmatprep.subr.mxu0 0.0
    %203 = vmatpush1.msra.mxu0 0.0
    %204 = vmatprep.subr.mxu0 0.0
    %205 = vmatpush1.msra.mxu0 0.0
    %206 = vmatprep.subr.mxu0 0.0
    %207 = vmatpush1.msra.mxu0 0.0
    %208 = vmatprep.subr.mxu0 0.0
    %209 = vmatpush1.msra.mxu0 0.0
    %210 = vmatprep.subr.mxu0 0.0
    %211 = vmatpush1.msra.mxu0 0.0
    %212 = vmatprep.subr.mxu0 0.0
    %213 = vmatpush1.msra.mxu0 0.0
    %214 = vmatprep.subr.mxu0 0.0
    %215 = vmatpush1.msra.mxu0 0.0
    %216 = vmatprep.subr.mxu0 0.0
    %217 = vmatpush1.msra.mxu0 0.0
    %218 = vmatprep.subr.mxu0 0.0
    %219 = vmatpush1.msra.mxu0 0.0
    %220 = vmatprep.subr.mxu0 0.0
    %221 = vmatpush1.msra.mxu0 0.0
    %222 = vmatprep.subr.mxu0 0.0
    %223 = vmatpush1.msra.mxu0 0.0
    %224 = vmatprep.mubr.f32.mxu0 0.0
    %225 = vmatmul.mubr.f32.gmra.mrb[0].mxu0 %v64
    %v226 = vpop.f32.mrb[0].mxu0
    %v227 = vadd.f32 0.0, %v226
    %v228 = vpop.f32.mrb[0].mxu0
    %229 = vmatprep.mubr.f32.mxu0 0.0
    %230 = vmatmul.mubr.f32.gmra.mrb[0].mxu0 %v67
    %v231 = vpop.f32.mrb[0].mxu0
    %v232 = vadd.f32 0.0, %v231
    %v233 = vpop.f32.mrb[0].mxu0
    %234 = vmatprep.mubr.f32.mxu0 0.0
    %235 = vmatmul.mubr.f32.gmra.mrb[0].mxu0 %v70
    %v236 = vpop.f32.mrb[0].mxu0
    %v237 = vadd.f32 0.0, %v236
    %v238 = vpop.f32.mrb[0].mxu0
    %239 = vmatprep.mubr.f32.mxu0 0.0
    %240 = vmatmul.mubr.f32.gmra.mrb[0].mxu0 %v73
    %v241 = vpop.f32.mrb[0].mxu0
    %v242 = vadd.f32 0.0, %v241
    %v243 = vpop.f32.mrb[0].mxu0
    %244 = vdwg.mxu0
    %v245 = vmul.f32 %v227, 2.0
    %v246 = vmul.f32 %v232, 2.0
    %v247 = vmul.f32 %v237, 2.0
    %v248 = vmul.f32 %v242, 2.0
    %v249 = vsub.f32 %v245, %v28
    %v250 = vsub.f32 %v246, %v29
    %v251 = vsub.f32 %v247, %v30
    %v252 = vsub.f32 %v248, %v31
    %257 = vrot.lane.b32.xlu0 %v142, 36
    %v258 = vpop.permute.xlu0 %257
    %259 = vrot.lane.b32.xlu0 %v147, 36
    %v260 = vpop.permute.xlu0 %259
    %261 = vrot.lane.b32.xlu0 %v152, 36
    %v262 = vpop.permute.xlu0 %261
    %263 = vrot.lane.b32.xlu0 %v157, 36
    %v264 = vpop.permute.xlu0 %263
    %273 = vrot.lane.b32.xlu0 %v249, 72
    %v274 = vpop.permute.xlu0 %273
    %275 = vrot.lane.b32.xlu0 %v250, 72
    %v276 = vpop.permute.xlu0 %275
    %277 = vrot.lane.b32.xlu0 %v251, 72
    %v278 = vpop.permute.xlu0 %277
    %279 = vrot.lane.b32.xlu0 %v252, 72
    %v280 = vpop.permute.xlu0 %279
    %vm285 = vcmask 293888
    %v286 = vsel %vm285, %v28, %v258
    %v287 = vsel %vm285, %v29, %v260
    %v288 = vsel %vm285, %v30, %v262
    %v289 = vsel %vm285, %v31, %v264
    %vm290 = vcmask 588800
    %v291 = vsel %vm290, %v286, %v274
    %v292 = vsel %vm290, %v287, %v276
    %v293 = vsel %vm290, %v288, %v278
    %v294 = vsel %vm290, %v289, %v280
    %v296 = vlaneseq
    %v297 = vshrl.u32 %v296, 7
    %v298 = vsub.s32 0, %v297
    %v299 = vrot.slane %v60, %v298
    %vm301 = vcmask 883712
    %v303 = vsel %vm301, %v291, 0
    %v306 = vsel %vm301, %v292, 0
    %v309 = vsel %vm301, %v293, 0
    %v312 = vsel %vm301, %v294, 0
    %vm314 = vcmask 1043456
    %v316 = vsel %vm314, %v45, 0
    %318 = vmatprep.subr.mxu0 0.0
    %319 = vmatpush1.msra.mxu0 %v32
    %320 = vmatprep.subr.mxu0 0.0
    %321 = vmatpush1.msra.mxu0 %v33
    %322 = vmatprep.subr.mxu0 0.0
    %323 = vmatpush1.msra.mxu0 %v34
    %324 = vmatprep.subr.mxu0 0.0
    %325 = vmatpush1.msra.mxu0 %v35
    %326 = vmatprep.subr.mxu0 0.0
    %327 = vmatpush1.msra.mxu0 %v36
    %328 = vmatprep.subr.mxu0 0.0
    %329 = vmatpush1.msra.mxu0 %v37
    %330 = vmatprep.subr.mxu0 0.0
    %331 = vmatpush1.msra.mxu0 %v38
    %332 = vmatprep.subr.mxu0 0.0
    %333 = vmatpush1.msra.mxu0 %v39
    %334 = vmatprep.subr.mxu0 0.0
    %335 = vmatpush1.msra.mxu0 %v40
    %336 = vmatprep.subr.mxu0 0.0
    %337 = vmatpush1.msra.mxu0 %v41
    %338 = vmatprep.subr.mxu0 0.0
    %339 = vmatpush1.msra.mxu0 %v42
    %340 = vmatprep.subr.mxu0 0.0
    %341 = vmatpush1.msra.mxu0 %v43
    %342 = vmatprep.subr.mxu0 0.0
    %343 = vmatpush1.msra.mxu0 %v44
    %344 = vmatprep.subr.mxu0 0.0
    %345 = vmatpush1.msra.mxu0 %v316
    %346 = vmatprep.subr.mxu0 0.0
    %347 = vmatpush1.msra.mxu0 0.0
    %348 = vmatprep.subr.mxu0 0.0
    %349 = vmatpush1.msra.mxu0 0.0
    %350 = vmatprep.subr.mxu0 0.0
    %351 = vmatpush1.msra.mxu0 0.0
    %352 = vmatprep.subr.mxu0 0.0
    %353 = vmatpush1.msra.mxu0 0.0
    %354 = vmatprep.subr.mxu0 0.0
    %355 = vmatpush1.msra.mxu0 0.0
    %356 = vmatprep.subr.mxu0 0.0
    %357 = vmatpush1.msra.mxu0 0.0
    %358 = vmatprep.subr.mxu0 0.0
    %359 = vmatpush1.msra.mxu0 0.0
    %360 = vmatprep.subr.mxu0 0.0
    %361 = vmatpush1.msra.mxu0 0.0
    %362 = vmatprep.subr.mxu0 0.0
    %363 = vmatpush1.msra.mxu0 0.0
    %364 = vmatprep.subr.mxu0 0.0
    %365 = vmatpush1.msra.mxu0 0.0
    %366 = vmatprep.subr.mxu0 0.0
    %367 = vmatpush1.msra.mxu0 0.0
    %368 = vmatprep.subr.mxu0 0.0
    %369 = vmatpush1.msra.mxu0 0.0
    %370 = vmatprep.subr.mxu0 0.0
    %371 = vmatpush1.msra.mxu0 0.0
    %372 = vmatprep.subr.mxu0 0.0
    %373 = vmatpush1.msra.mxu0 0.0
    %374 = vmatprep.subr.mxu0 0.0
    %375 = vmatpush1.msra.mxu0 0.0
    %376 = vmatprep.subr.mxu0 0.0
    %377 = vmatpush1.msra.mxu0 0.0
    %378 = vmatprep.subr.mxu0 0.0
    %379 = vmatpush1.msra.mxu0 0.0
    %380 = vmatprep.subr.mxu0 0.0
    %381 = vmatpush1.msra.mxu0 0.0
    %382 = vmatprep.mubr.f32.mxu0 0.0
    %383 = vmatmul.mubr.f32.gmra.mrb[0].mxu0 %v303
    %v384 = vpop.f32.mrb[0].mxu0
    %v385 = vadd.f32 %v299, %v384
    %v386 = vpop.f32.mrb[0].mxu0
    %387 = vmatprep.mubr.f32.mxu0 0.0
    %388 = vmatmul.mubr.f32.gmra.mrb[0].mxu0 %v306
    %v389 = vpop.f32.mrb[0].mxu0
    %v390 = vadd.f32 %v299, %v389
    %v391 = vpop.f32.mrb[0].mxu0
    %392 = vmatprep.mubr.f32.mxu0 0.0
    %393 = vmatmul.mubr.f32.gmra.mrb[0].mxu0 %v309
    %v394 = vpop.f32.mrb[0].mxu0
    %v395 = vadd.f32 %v299, %v394
    %v396 = vpop.f32.mrb[0].mxu0
    %397 = vmatprep.mubr.f32.mxu0 0.0
    %398 = vmatmul.mubr.f32.gmra.mrb[0].mxu0 %v312
    %v399 = vpop.f32.mrb[0].mxu0
    %v400 = vadd.f32 %v299, %v399
    %v401 = vpop.f32.mrb[0].mxu0
    %402 = vdwg.mxu0
    %v403 = vxor.u32 %v385, 2147483648
    %v404 = vxor.u32 %v390, 2147483648
    %v405 = vxor.u32 %v395, 2147483648
    %v406 = vxor.u32 %v400, 2147483648
    %v407 = vmul.f32 %v403, 1.442695
    %v408 = vpow.pop %v407
    %v409 = vmul.f32 %v404, 1.442695
    %v410 = vpow.pop %v409
    %v411 = vmul.f32 %v405, 1.442695
    %v412 = vpow.pop %v411
    %v413 = vmul.f32 %v406, 1.442695
    %v414 = vpow.pop %v413
    %v415 = vadd.f32 %v408, 1.0
    %v416 = vadd.f32 %v410, 1.0
    %v417 = vadd.f32 %v412, 1.0
    %v418 = vadd.f32 %v414, 1.0
    %v419 = vrcp.pop %v415
    %v420 = vmul.f32 1.0, %v419
    %v421 = vrcp.pop %v416
    %v422 = vmul.f32 1.0, %v421
    %v423 = vrcp.pop %v417
    %v424 = vmul.f32 1.0, %v423
    %v425 = vrcp.pop %v418
    %v426 = vmul.f32 1.0, %v425
    %431 = vrot.lane.b32.xlu0 %v28, 124
    %v432 = vpop.permute.xlu0 %431
    %433 = vrot.lane.b32.xlu0 %v29, 124
    %v434 = vpop.permute.xlu0 %433
    %435 = vrot.lane.b32.xlu0 %v30, 124
    %v436 = vpop.permute.xlu0 %435
    %437 = vrot.lane.b32.xlu0 %v31, 124
    %v438 = vpop.permute.xlu0 %437
    %v443 = vmul.f32 %v420, %v432
    %v444 = vmul.f32 %v422, %v434
    %v445 = vmul.f32 %v424, %v436
    %v446 = vmul.f32 %v426, %v438
    %447 = vmatprep.subr.mxu0 0.0
    %448 = vmatpush1.msra.mxu0 %v443
    %449 = vmatprep.subr.mxu0 0.0
    %450 = vmatpush1.msra.mxu0 %v444
    %451 = vmatprep.subr.mxu0 0.0
    %452 = vmatpush1.msra.mxu0 %v445
    %453 = vmatprep.subr.mxu0 0.0
    %454 = vmatpush1.msra.mxu0 %v446
    %455 = vmatprep.subr.mxu0 0.0
    %456 = vmatpush1.msra.mxu0 0.0
    %457 = vmatprep.subr.mxu0 0.0
    %458 = vmatpush1.msra.mxu0 0.0
    %459 = vmatprep.subr.mxu0 0.0
    %460 = vmatpush1.msra.mxu0 0.0
    %461 = vmatprep.subr.mxu0 0.0
    %462 = vmatpush1.msra.mxu0 0.0
    %463 = vmatprep.subr.mxu0 0.0
    %464 = vmatpush1.msra.mxu0 0.0
    %465 = vmatprep.subr.mxu0 0.0
    %466 = vmatpush1.msra.mxu0 0.0
    %467 = vmatprep.subr.mxu0 0.0
    %468 = vmatpush1.msra.mxu0 0.0
    %469 = vmatprep.subr.mxu0 0.0
    %470 = vmatpush1.msra.mxu0 0.0
    %471 = vmatprep.subr.mxu0 0.0
    %472 = vmatpush1.msra.mxu0 0.0
    %473 = vmatprep.subr.mxu0 0.0
    %474 = vmatpush1.msra.mxu0 0.0
    %475 = vmatprep.subr.mxu0 0.0
    %476 = vmatpush1.msra.mxu0 0.0
    %477 = vmatprep.subr.mxu0 0.0
    %478 = vmatpush1.msra.mxu0 0.0
    %479 = vmatprep.subr.mxu0 0.0
    %480 = vmatpush1.msra.mxu0 0.0
    %481 = vmatprep.subr.mxu0 0.0
    %482 = vmatpush1.msra.mxu0 0.0
    %483 = vmatprep.subr.mxu0 0.0
    %484 = vmatpush1.msra.mxu0 0.0
    %485 = vmatprep.subr.mxu0 0.0
    %486 = vmatpush1.msra.mxu0 0.0
    %487 = vmatprep.subr.mxu0 0.0
    %488 = vmatpush1.msra.mxu0 0.0
    %489 = vmatprep.subr.mxu0 0.0
    %490 = vmatpush1.msra.mxu0 0.0
    %491 = vmatprep.subr.mxu0 0.0
    %492 = vmatpush1.msra.mxu0 0.0
    %493 = vmatprep.subr.mxu0 0.0
    %494 = vmatpush1.msra.mxu0 0.0
    %495 = vmatprep.subr.mxu0 0.0
    %496 = vmatpush1.msra.mxu0 0.0
    %497 = vmatprep.subr.mxu0 0.0
    %498 = vmatpush1.msra.mxu0 0.0
    %499 = vmatprep.subr.mxu0 0.0
    %500 = vmatpush1.msra.mxu0 0.0
    %501 = vmatprep.subr.mxu0 0.0
    %502 = vmatpush1.msra.mxu0 0.0
    %503 = vmatprep.subr.mxu0 0.0
    %504 = vmatpush1.msra.mxu0 0.0
    %505 = vmatprep.subr.mxu0 0.0
    %506 = vmatpush1.msra.mxu0 0.0
    %507 = vmatprep.subr.mxu0 0.0
    %508 = vmatpush1.msra.mxu0 0.0
    %509 = vmatprep.subr.mxu0 0.0
    %510 = vmatpush1.msra.mxu0 0.0
    %511 = vmatprep.mubr.f32.mxu0 0.0
    %512 = vmatmul.mubr.f32.gmra.mrb[0].mxu0 %v64
    %v513 = vpop.f32.mrb[0].mxu0
    %v514 = vadd.f32 0.0, %v513
    %v515 = vpop.f32.mrb[0].mxu0
    %516 = vmatprep.mubr.f32.mxu0 0.0
    %517 = vmatmul.mubr.f32.gmra.mrb[0].mxu0 %v67
    %v518 = vpop.f32.mrb[0].mxu0
    %v519 = vadd.f32 0.0, %v518
    %v520 = vpop.f32.mrb[0].mxu0
    %521 = vmatprep.mubr.f32.mxu0 0.0
    %522 = vmatmul.mubr.f32.gmra.mrb[0].mxu0 %v70
    %v523 = vpop.f32.mrb[0].mxu0
    %v524 = vadd.f32 0.0, %v523
    %v525 = vpop.f32.mrb[0].mxu0
    %526 = vmatprep.mubr.f32.mxu0 0.0
    %527 = vmatmul.mubr.f32.gmra.mrb[0].mxu0 %v73
    %v528 = vpop.f32.mrb[0].mxu0
    %v529 = vadd.f32 0.0, %v528
    %v530 = vpop.f32.mrb[0].mxu0
    %531 = vdwg.mxu0
    %532 = vmatprep.subr.mxu0 0.0
    %533 = vmatpush1.msra.mxu0 %v514
    %534 = vmatprep.subr.mxu0 0.0
    %535 = vmatpush1.msra.mxu0 %v519
    %536 = vmatprep.subr.mxu0 0.0
    %537 = vmatpush1.msra.mxu0 %v524
    %538 = vmatprep.subr.mxu0 0.0
    %539 = vmatpush1.msra.mxu0 %v529
    %540 = vmatprep.subr.mxu0 0.0
    %541 = vmatpush1.msra.mxu0 0.0
    %542 = vmatprep.subr.mxu0 0.0
    %543 = vmatpush1.msra.mxu0 0.0
    %544 = vmatprep.subr.mxu0 0.0
    %545 = vmatpush1.msra.mxu0 0.0
    %546 = vmatprep.subr.mxu0 0.0
    %547 = vmatpush1.msra.mxu0 0.0
    %548 = vmatprep.subr.mxu0 0.0
    %549 = vmatpush1.msra.mxu0 0.0
    %550 = vmatprep.subr.mxu0 0.0
    %551 = vmatpush1.msra.mxu0 0.0
    %552 = vmatprep.subr.mxu0 0.0
    %553 = vmatpush1.msra.mxu0 0.0
    %554 = vmatprep.subr.mxu0 0.0
    %555 = vmatpush1.msra.mxu0 0.0
    %556 = vmatprep.subr.mxu0 0.0
    %557 = vmatpush1.msra.mxu0 0.0
    %558 = vmatprep.subr.mxu0 0.0
    %559 = vmatpush1.msra.mxu0 0.0
    %560 = vmatprep.subr.mxu0 0.0
    %561 = vmatpush1.msra.mxu0 0.0
    %562 = vmatprep.subr.mxu0 0.0
    %563 = vmatpush1.msra.mxu0 0.0
    %564 = vmatprep.subr.mxu0 0.0
    %565 = vmatpush1.msra.mxu0 0.0
    %566 = vmatprep.subr.mxu0 0.0
    %567 = vmatpush1.msra.mxu0 0.0
    %568 = vmatprep.subr.mxu0 0.0
    %569 = vmatpush1.msra.mxu0 0.0
    %570 = vmatprep.subr.mxu0 0.0
    %571 = vmatpush1.msra.mxu0 0.0
    %572 = vmatprep.subr.mxu0 0.0
    %573 = vmatpush1.msra.mxu0 0.0
    %574 = vmatprep.subr.mxu0 0.0
    %575 = vmatpush1.msra.mxu0 0.0
    %576 = vmatprep.subr.mxu0 0.0
    %577 = vmatpush1.msra.mxu0 0.0
    %578 = vmatprep.subr.mxu0 0.0
    %579 = vmatpush1.msra.mxu0 0.0
    %580 = vmatprep.subr.mxu0 0.0
    %581 = vmatpush1.msra.mxu0 0.0
    %582 = vmatprep.subr.mxu0 0.0
    %583 = vmatpush1.msra.mxu0 0.0
    %584 = vmatprep.subr.mxu0 0.0
    %585 = vmatpush1.msra.mxu0 0.0
    %586 = vmatprep.subr.mxu0 0.0
    %587 = vmatpush1.msra.mxu0 0.0
    %588 = vmatprep.subr.mxu0 0.0
    %589 = vmatpush1.msra.mxu0 0.0
    %590 = vmatprep.subr.mxu0 0.0
    %591 = vmatpush1.msra.mxu0 0.0
    %592 = vmatprep.subr.mxu0 0.0
    %593 = vmatpush1.msra.mxu0 0.0
    %594 = vmatprep.subr.mxu0 0.0
    %595 = vmatpush1.msra.mxu0 0.0
    %596 = vmatprep.mubr.f32.mxu0 0.0
    %597 = vmatmul.mubr.f32.gmra.mrb[0].mxu0 %v64
    %v598 = vpop.f32.mrb[0].mxu0
    %v599 = vadd.f32 0.0, %v598
    %v600 = vpop.f32.mrb[0].mxu0
    %601 = vmatprep.mubr.f32.mxu0 0.0
    %602 = vmatmul.mubr.f32.gmra.mrb[0].mxu0 %v67
    %v603 = vpop.f32.mrb[0].mxu0
    %v604 = vadd.f32 0.0, %v603
    %v605 = vpop.f32.mrb[0].mxu0
    %606 = vmatprep.mubr.f32.mxu0 0.0
    %607 = vmatmul.mubr.f32.gmra.mrb[0].mxu0 %v70
    %v608 = vpop.f32.mrb[0].mxu0
    %v609 = vadd.f32 0.0, %v608
    %v610 = vpop.f32.mrb[0].mxu0
    %611 = vmatprep.mubr.f32.mxu0 0.0
    %612 = vmatmul.mubr.f32.gmra.mrb[0].mxu0 %v73
    %v613 = vpop.f32.mrb[0].mxu0
    %v614 = vadd.f32 0.0, %v613
    %v615 = vpop.f32.mrb[0].mxu0
    %616 = vdwg.mxu0
    %v617 = vmul.f32 %v599, 2.0
    %v618 = vmul.f32 %v604, 2.0
    %v619 = vmul.f32 %v609, 2.0
    %v620 = vmul.f32 %v614, 2.0
    %v621 = vsub.f32 %v617, %v443
    %v622 = vsub.f32 %v618, %v444
    %v623 = vsub.f32 %v619, %v445
    %v624 = vsub.f32 %v620, %v446
    %629 = vrot.lane.b32.xlu0 %v443, 4
    %v630 = vpop.permute.xlu0 %629
    %631 = vrot.lane.b32.xlu0 %v444, 4
    %v632 = vpop.permute.xlu0 %631
    %633 = vrot.lane.b32.xlu0 %v445, 4
    %v634 = vpop.permute.xlu0 %633
    %635 = vrot.lane.b32.xlu0 %v446, 4
    %v636 = vpop.permute.xlu0 %635
    %645 = vrot.lane.b32.xlu0 %v514, 40
    %v646 = vpop.permute.xlu0 %645
    %647 = vrot.lane.b32.xlu0 %v519, 40
    %v648 = vpop.permute.xlu0 %647
    %649 = vrot.lane.b32.xlu0 %v524, 40
    %v650 = vpop.permute.xlu0 %649
    %651 = vrot.lane.b32.xlu0 %v529, 40
    %v652 = vpop.permute.xlu0 %651
    %661 = vrot.lane.b32.xlu0 %v621, 76
    %v662 = vpop.permute.xlu0 %661
    %663 = vrot.lane.b32.xlu0 %v622, 76
    %v664 = vpop.permute.xlu0 %663
    %665 = vrot.lane.b32.xlu0 %v623, 76
    %v666 = vpop.permute.xlu0 %665
    %667 = vrot.lane.b32.xlu0 %v624, 76
    %v668 = vpop.permute.xlu0 %667
    %vm673 = vcmask 31744
    %v674 = vsel %vm673, %v28, %v630
    %v675 = vsel %vm673, %v29, %v632
    %v676 = vsel %vm673, %v30, %v634
    %v677 = vsel %vm673, %v31, %v636
    %v678 = vsel %vm285, %v674, %v258
    %v679 = vsel %vm285, %v675, %v260
    %v680 = vsel %vm285, %v676, %v262
    %v681 = vsel %vm285, %v677, %v264
    %vm682 = vcmask 326656
    %v683 = vsel %vm682, %v678, %v646
    %v684 = vsel %vm682, %v679, %v648
    %v685 = vsel %vm682, %v680, %v650
    %v686 = vsel %vm682, %v681, %v652
    %v687 = vsel %vm290, %v683, %v274
    %v688 = vsel %vm290, %v684, %v276
    %v689 = vsel %vm290, %v685, %v278
    %v690 = vsel %vm290, %v686, %v280
    %vm691 = vcmask 621568
    %v692 = vsel %vm691, %v687, %v662
    %v693 = vsel %vm691, %v688, %v664
    %v694 = vsel %vm691, %v689, %v666
    %v695 = vsel %vm691, %v690, %v668
    %v697 = vlaneseq
    %v698 = vshrl.u32 %v697, 7
    %v699 = vsub.s32 0, %v698
    %v700 = vrot.slane %v61, %v699
    %v703 = vsel %vm301, %v692, 0
    %v706 = vsel %vm301, %v693, 0
    %v709 = vsel %vm301, %v694, 0
    %v712 = vsel %vm301, %v695, 0
    %v715 = vsel %vm314, %v59, 0
    %717 = vmatprep.subr.mxu0 0.0
    %718 = vmatpush1.msra.mxu0 %v46
    %719 = vmatprep.subr.mxu0 0.0
    %720 = vmatpush1.msra.mxu0 %v47
    %721 = vmatprep.subr.mxu0 0.0
    %722 = vmatpush1.msra.mxu0 %v48
    %723 = vmatprep.subr.mxu0 0.0
    %724 = vmatpush1.msra.mxu0 %v49
    %725 = vmatprep.subr.mxu0 0.0
    %726 = vmatpush1.msra.mxu0 %v50
    %727 = vmatprep.subr.mxu0 0.0
    %728 = vmatpush1.msra.mxu0 %v51
    %729 = vmatprep.subr.mxu0 0.0
    %730 = vmatpush1.msra.mxu0 %v52
    %731 = vmatprep.subr.mxu0 0.0
    %732 = vmatpush1.msra.mxu0 %v53
    %733 = vmatprep.subr.mxu0 0.0
    %734 = vmatpush1.msra.mxu0 %v54
    %735 = vmatprep.subr.mxu0 0.0
    %736 = vmatpush1.msra.mxu0 %v55
    %737 = vmatprep.subr.mxu0 0.0
    %738 = vmatpush1.msra.mxu0 %v56
    %739 = vmatprep.subr.mxu0 0.0
    %740 = vmatpush1.msra.mxu0 %v57
    %741 = vmatprep.subr.mxu0 0.0
    %742 = vmatpush1.msra.mxu0 %v58
    %743 = vmatprep.subr.mxu0 0.0
    %744 = vmatpush1.msra.mxu0 %v715
    %745 = vmatprep.subr.mxu0 0.0
    %746 = vmatpush1.msra.mxu0 0.0
    %747 = vmatprep.subr.mxu0 0.0
    %748 = vmatpush1.msra.mxu0 0.0
    %749 = vmatprep.subr.mxu0 0.0
    %750 = vmatpush1.msra.mxu0 0.0
    %751 = vmatprep.subr.mxu0 0.0
    %752 = vmatpush1.msra.mxu0 0.0
    %753 = vmatprep.subr.mxu0 0.0
    %754 = vmatpush1.msra.mxu0 0.0
    %755 = vmatprep.subr.mxu0 0.0
    %756 = vmatpush1.msra.mxu0 0.0
    %757 = vmatprep.subr.mxu0 0.0
    %758 = vmatpush1.msra.mxu0 0.0
    %759 = vmatprep.subr.mxu0 0.0
    %760 = vmatpush1.msra.mxu0 0.0
    %761 = vmatprep.subr.mxu0 0.0
    %762 = vmatpush1.msra.mxu0 0.0
    %763 = vmatprep.subr.mxu0 0.0
    %764 = vmatpush1.msra.mxu0 0.0
    %765 = vmatprep.subr.mxu0 0.0
    %766 = vmatpush1.msra.mxu0 0.0
    %767 = vmatprep.subr.mxu0 0.0
    %768 = vmatpush1.msra.mxu0 0.0
    %769 = vmatprep.subr.mxu0 0.0
    %770 = vmatpush1.msra.mxu0 0.0
    %771 = vmatprep.subr.mxu0 0.0
    %772 = vmatpush1.msra.mxu0 0.0
    %773 = vmatprep.subr.mxu0 0.0
    %774 = vmatpush1.msra.mxu0 0.0
    %775 = vmatprep.subr.mxu0 0.0
    %776 = vmatpush1.msra.mxu0 0.0
    %777 = vmatprep.subr.mxu0 0.0
    %778 = vmatpush1.msra.mxu0 0.0
    %779 = vmatprep.subr.mxu0 0.0
    %780 = vmatpush1.msra.mxu0 0.0
    %781 = vmatprep.mubr.f32.mxu0 0.0
    %782 = vmatmul.mubr.f32.gmra.mrb[0].mxu0 %v703
    %v783 = vpop.f32.mrb[0].mxu0
    %v784 = vadd.f32 %v700, %v783
    %v785 = vpop.f32.mrb[0].mxu0
    %786 = vmatprep.mubr.f32.mxu0 0.0
    %787 = vmatmul.mubr.f32.gmra.mrb[0].mxu0 %v706
    %v788 = vpop.f32.mrb[0].mxu0
    %v789 = vadd.f32 %v700, %v788
    %v790 = vpop.f32.mrb[0].mxu0
    %791 = vmatprep.mubr.f32.mxu0 0.0
    %792 = vmatmul.mubr.f32.gmra.mrb[0].mxu0 %v709
    %v793 = vpop.f32.mrb[0].mxu0
    %v794 = vadd.f32 %v700, %v793
    %v795 = vpop.f32.mrb[0].mxu0
    %796 = vmatprep.mubr.f32.mxu0 0.0
    %797 = vmatmul.mubr.f32.gmra.mrb[0].mxu0 %v712
    %v798 = vpop.f32.mrb[0].mxu0
    %v799 = vadd.f32 %v700, %v798
    %v800 = vpop.f32.mrb[0].mxu0
    %801 = vdwg.mxu0
    %v802 = vtanh.pop %v784
    %v803 = vtanh.pop %v789
    %v804 = vtanh.pop %v794
    %v805 = vtanh.pop %v799
    %806 = vrot.lane.b32.xlu0 %v28, 28
    %v807 = vpop.permute.xlu0 %806
    %808 = vrot.lane.b32.xlu0 %v29, 28
    %v809 = vpop.permute.xlu0 %808
    %810 = vrot.lane.b32.xlu0 %v30, 28
    %v811 = vpop.permute.xlu0 %810
    %812 = vrot.lane.b32.xlu0 %v31, 28
    %v813 = vpop.permute.xlu0 %812
    %v818 = vmul.f32 %v420, %v807
    %v819 = vmul.f32 %v422, %v809
    %v820 = vmul.f32 %v424, %v811
    %v821 = vmul.f32 %v426, %v813
    %v822 = vsub.f32 1.0, %v420
    %v823 = vsub.f32 1.0, %v422
    %v824 = vsub.f32 1.0, %v424
    %v825 = vsub.f32 1.0, %v426
    %830 = vrot.lane.b32.xlu0 %v802, 32
    %v831 = vpop.permute.xlu0 %830
    %832 = vrot.lane.b32.xlu0 %v803, 32
    %v833 = vpop.permute.xlu0 %832
    %834 = vrot.lane.b32.xlu0 %v804, 32
    %v835 = vpop.permute.xlu0 %834
    %836 = vrot.lane.b32.xlu0 %v805, 32
    %v837 = vpop.permute.xlu0 %836
    %v842 = vmul.f32 %v822, %v831
    %v843 = vmul.f32 %v823, %v833
    %v844 = vmul.f32 %v824, %v835
    %v845 = vmul.f32 %v825, %v837
    %v846 = vadd.f32 %v818, %v842
    %v847 = vadd.f32 %v819, %v843
    %v848 = vadd.f32 %v820, %v844
    %v849 = vadd.f32 %v821, %v845
    %854 = vrot.lane.b32.xlu0 %v846, 96
    %v855 = vpop.permute.xlu0 %854
    %856 = vrot.lane.b32.xlu0 %v847, 96
    %v857 = vpop.permute.xlu0 %856
    %858 = vrot.lane.b32.xlu0 %v848, 96
    %v859 = vpop.permute.xlu0 %858
    %860 = vrot.lane.b32.xlu0 %v849, 96
    %v861 = vpop.permute.xlu0 %860
    %866 = vst.msk [vmem:[#allocation2] sm:$0xff] %vm62, %v855
    %867 = vst.msk [vmem:[#allocation2 + $0x8] sm:$0xff] %vm62, %v857
    %868 = vst.msk [vmem:[#allocation2 + $0x10] sm:$0xff] %vm62, %v859
    %869 = vst.msk [vmem:[#allocation2 + $0x18] sm:$0xff] %vm62, %v861
    // Predicated region
    $region26: #{tpu_custom_call.1} parent=1 // pred_check
      _
    $region27: #{tpu_custom_call.1} parent=1 // pred_check_branch
      %871 = sbr.rel (0) target = $region29
    $region28: #{tpu_custom_call.1} parent=1 // pred_region
      %s873 = ssub.s32 512, 512
      %874 = vsyncadd [#allocation3], %s873
      %s875 = sshll.u32 [#allocation2], 4
      %s876 = int_to_ptr.vmem [resolvable:$true] %s875
      %881 = dma.vmem_to_hbm [thread:$0]  %s876, 512, %s6, [#allocation3], 128, 128, 8
    $region29: #{tpu_custom_call.1} parent=1 // pred_fallthru
      _
    // Predicated region
    $region30: #{tpu_custom_call.1} parent=1 // pred_check
      _
    $region31: #{tpu_custom_call.1} parent=1 // pred_check_branch
      %883 = sbr.rel (0) target = $region33
    $region32: #{tpu_custom_call.1} parent=1 // pred_region
      %884 = dma.done [#allocation3], 512
    $region33: #{tpu_custom_call.1} parent=1 // pred_fallthru
      _
    %885 = vsyncpa [#allocation3], 1

</llo_original>
